<compile_context>
chip_gen: v7x
topology: tpu7x:2x2x1
jax: 0.10.0
libtpu: 0.0.40
codegen_flags: <defaults>
</compile_context>

<pallas_src>
import functools

import jax
import jax.numpy as jnp
from jax.experimental import pallas as pl
from jax.experimental.pallas import tpu as pltpu

LANE = 128
SUBLANE = 8
NUM_CORES = 2                    # v7x has 2 TCs; harmless (sequential) on v5e/v6e
SUB_ROWS = 512                   # in-kernel sub-chunk: 512x128 f32 = 256 KiB
TARGET_BLOCK_BYTES = 8 * 2**20   # ~8 MiB of input (both streams) per grid step
MAX_BLOCK_ROWS = 32768


def _dice_kernel(x_ref, t_ref, o_ref, acc_i_ref, acc_d_ref, *,
                 num_valid_blocks, blocks_per_core, block_rows, sub_rows):
    c = pl.program_id(0)             # parallel (core) axis
    b = pl.program_id(1)             # per-core block axis (reduction)
    nsteps = pl.num_programs(1)

    @pl.when(b == 0)
    def _():
        acc_i_ref[...] = jnp.zeros_like(acc_i_ref)   # partial sum(sigmoid(x) * t)
        acc_d_ref[...] = jnp.zeros_like(acc_d_ref)   # partial sum(sigmoid(x) + t)

    g = c * blocks_per_core + b      # global block index

    @pl.when(g < num_valid_blocks)
    def _():
        n_chunks = block_rows // sub_rows

        def chunk(j, carry):
            off = pl.multiple_of(j * sub_rows, sub_rows)
            xs = x_ref[pl.ds(off, sub_rows), :].astype(jnp.float32)
            ts = t_ref[pl.ds(off, sub_rows), :].astype(jnp.float32)
            # jax.nn.sigmoid lowers to the EUP logistic -> VALU stays free.
            s = jax.nn.sigmoid(xs)
            # (sub_rows,128) -> (sub_rows//8, 8, 128); summing axis 0 is a pure
            # per-vreg VPU add chain (no XLU), leaving an (8,128) residual.
            prod = (s * ts).reshape(sub_rows // SUBLANE, SUBLANE, LANE)
            den = (s + ts).reshape(sub_rows // SUBLANE, SUBLANE, LANE)
            acc_i_ref[...] += prod.sum(axis=0)
            acc_d_ref[...] += den.sum(axis=0)
            return carry

        jax.lax.fori_loop(0, n_chunks, chunk, 0)

    @pl.when(b == nsteps - 1)
    def _():
        # Per-core partial vector accumulators; combined (single cheap XLU
        # reduction + divide) in the JAX wrapper.
        o_ref[0, 0] = acc_i_ref[...]
        o_ref[0, 1] = acc_d_ref[...]


def _tail_sums(x_tail, t_tail):
    xs = jax.nn.sigmoid(x_tail.astype(jnp.float32))
    ts = t_tail.astype(jnp.float32)
    return jnp.sum(xs * ts), jnp.sum(xs) + jnp.sum(ts)


def _finalize(inter, den, smooth):
    dice = (2.0 * inter + smooth) / (den + smooth)
    return 1.0 - dice


def dice_loss(inputs, targets, smooth=1.0):
    """Pallas TPU implementation of DiceLoss.forward. Returns a scalar f32."""
    smooth = float(smooth)
    x = jnp.ravel(inputs)            # keep original dtypes: cast happens in-kernel
    t = jnp.ravel(targets)
    n = x.shape[0]

    rows_avail = n // LANE
    if rows_avail < SUBLANE:
        # Too small for even one (8,128) tile (includes n == 0): pure JAX path.
        inter, den = _tail_sums(x, t)
        return _finalize(inter, den, smooth)

    # Byte-based block sizing: ~TARGET_BLOCK_BYTES of input per grid step
    # across both streams, so narrow dtypes get proportionally more rows.
    itembytes = x.dtype.itemsize + t.dtype.itemsize
    target_rows = max(SUBLANE, TARGET_BLOCK_BYTES // (LANE * itembytes))
    block_rows = int(min(target_rows, rows_avail, MAX_BLOCK_ROWS))
    if block_rows >= SUB_ROWS:
        block_rows = (block_rows // SUB_ROWS) * SUB_ROWS
        sub_rows = SUB_ROWS
    else:
        block_rows = (block_rows // SUBLANE) * SUBLANE
        sub_rows = block_rows

    block_elems = block_rows * LANE
    num_blocks = n // block_elems                 # full blocks only (>= 1 here)
    prefix = num_blocks * block_elems
    blocks_per_core = int(pl.cdiv(num_blocks, NUM_CORES))

    x2 = x[:prefix].reshape(num_blocks * block_rows, LANE)
    t2 = t[:prefix].reshape(num_blocks * block_rows, LANE)

    def in_index(c, b):
        # Clamp so the (at most one) padded grid step re-fetches a valid block;
        # its accumulation is skipped inside the kernel.
        g = jnp.minimum(c * blocks_per_core + b, num_blocks - 1)
        return (g, 0)

    block_bytes = block_rows * LANE * itembytes       # both streams, one step
    vmem_limit = int(min(48 * 2**20, max(32 * 2**20, 2 * block_bytes + 8 * 2**20)))

    partials = pl.pallas_call(
        functools.partial(
            _dice_kernel,
            num_valid_blocks=int(num_blocks),
            blocks_per_core=blocks_per_core,
            block_rows=block_rows,
            sub_rows=int(sub_rows),
        ),
        out_shape=jax.ShapeDtypeStruct((NUM_CORES, 2, SUBLANE, LANE), jnp.float32),
        grid_spec=pltpu.PrefetchScalarGridSpec(
            num_scalar_prefetch=0,
            grid=(NUM_CORES, blocks_per_core),
            in_specs=[
                pl.BlockSpec((block_rows, LANE), in_index),
                pl.BlockSpec((block_rows, LANE), in_index),
            ],
            out_specs=pl.BlockSpec((1, 2, SUBLANE, LANE),
                                   lambda c, b: (c, 0, 0, 0)),
            scratch_shapes=[
                pltpu.VMEM((SUBLANE, LANE), jnp.float32),
                pltpu.VMEM((SUBLANE, LANE), jnp.float32),
            ],
        ),
        compiler_params=pltpu.CompilerParams(
            dimension_semantics=("parallel", "arbitrary"),
            vmem_limit_bytes=vmem_limit,
        ),
    )(x2, t2)

    inter = jnp.sum(partials[:, 0])
    den = jnp.sum(partials[:, 1])

    if prefix < n:
        # Ragged tail (< one block): plain JAX, no full-array pad copy.
        t_inter, t_den = _tail_sums(x[prefix:], t[prefix:])
        inter = inter + t_inter
        den = den + t_den

    return _finalize(inter, den, smooth)


def _dice_loss_ref(inputs, targets, smooth=1.0):
    x = jax.nn.sigmoid(jnp.ravel(inputs).astype(jnp.float32))
    t = jnp.ravel(targets).astype(jnp.float32)
    inter = jnp.sum(x * t)
    dice = (2.0 * inter + smooth) / (jnp.sum(x) + jnp.sum(t) + smooth)
    return 1.0 - dice


if __name__ == "__main__":
    key = jax.random.PRNGKey(0)
    k1, k2 = jax.random.split(key)
    # NCHW-like shapes: batch=2, channels=4, spatial=16x16 (flattened inside).
    logits = jax.random.normal(k1, (2, 4, 16, 16), dtype=jnp.float32)
    targets = (jax.random.uniform(k2, (2, 4, 16, 16)) > 0.5).astype(jnp.float32)

    loss = jax.block_until_ready(dice_loss(logits, targets, smooth=1.0))
    ref = jax.block_until_ready(_dice_loss_ref(logits, targets, smooth=1.0))
    assert jnp.allclose(loss, ref, atol=1e-5, rtol=1e-5), (loss, ref)
    print("KERNEL_OK")
</pallas_src>

<mosaic_0001>
module attributes {stable_mosaic.version = 11 : i64} {
  func.func @_dice_kernel(%arg0: i32, %arg1: i32, %arg2: memref<16x128xf32, #tpu.memory_space<vmem>>, %arg3: memref<16x128xf32, #tpu.memory_space<vmem>>, %arg4: memref<1x2x8x128xf32, #tpu.memory_space<vmem>>, %arg5: memref<8x128xf32, #tpu.memory_space<vmem>>, %arg6: memref<8x128xf32, #tpu.memory_space<vmem>>) attributes {dimension_semantics = [#tpu.dimension_semantics<parallel>, #tpu.dimension_semantics<arbitrary>], iteration_bounds = array<i64: 2, 1>, scalar_prefetch = 0 : i64, scratch_operands = 2 : i64, tpu.core_type = #tpu.core_type<tc>, window_params = [{transform_indices = @transform_0, window_bounds = array<i64: 16, 128>}, {transform_indices = @transform_1, window_bounds = array<i64: 16, 128>}, {transform_indices = @transform_2, window_bounds = array<i64: 1, 2, 8, 128>}]} {
    %c0_i32 = arith.constant 0 : i32
    %0 = arith.cmpi eq, %arg1, %c0_i32 : i32
    %1 = arith.extui %0 : i1 to i32
    %c0_i32_0 = arith.constant 0 : i32
    %2 = arith.cmpi ne, %1, %c0_i32_0 : i32
    scf.if %2 {
      %cst = arith.constant 0.000000e+00 : f32
      %11 = vector.broadcast %cst : f32 to vector<8x128xf32>
      %c0 = arith.constant 0 : index
      %c0_5 = arith.constant 0 : index
      %12 = vector.load %arg5[%c0, %c0_5] : memref<8x128xf32, #tpu.memory_space<vmem>>, vector<8x128xf32>
      tpu.vector_store %arg5[%c0, %c0_5], %11 {strides = array<i32>} : memref<8x128xf32, #tpu.memory_space<vmem>>, vector<8x128xf32>,
      %cst_6 = arith.constant 0.000000e+00 : f32
      %13 = vector.broadcast %cst_6 : f32 to vector<8x128xf32>
      %c0_7 = arith.constant 0 : index
      %c0_8 = arith.constant 0 : index
      %14 = vector.load %arg6[%c0_7, %c0_8] : memref<8x128xf32, #tpu.memory_space<vmem>>, vector<8x128xf32>
      tpu.vector_store %arg6[%c0_7, %c0_8], %13 {strides = array<i32>} : memref<8x128xf32, #tpu.memory_space<vmem>>, vector<8x128xf32>,
    } else {
    }
    %c1_i32 = arith.constant 1 : i32
    %3 = arith.muli %arg0, %c1_i32 : i32
    %4 = arith.addi %3, %arg1 : i32
    %c1_i32_1 = arith.constant 1 : i32
    %5 = arith.cmpi slt, %4, %c1_i32_1 : i32
    %6 = arith.extui %5 : i1 to i32
    %c0_i32_2 = arith.constant 0 : i32
    %7 = arith.cmpi ne, %6, %c0_i32_2 : i32
    scf.if %7 {
      %c0_i32_5 = arith.constant 0 : i32
      %c16_i32 = arith.constant 16 : i32
      %11 = arith.muli %c0_i32_5, %c16_i32 : i32
      %12 = tpu.assume_multiple %11, 16 : i32
      %13 = arith.index_cast %12 : i32 to index
      %c0 = arith.constant 0 : index
      %14 = vector.load %arg2[%13, %c0] : memref<16x128xf32, #tpu.memory_space<vmem>>, vector<16x128xf32>
      %15 = arith.index_cast %12 : i32 to index
      %c0_6 = arith.constant 0 : index
      %16 = vector.load %arg3[%15, %c0_6] : memref<16x128xf32, #tpu.memory_space<vmem>>, vector<16x128xf32>
      %17 = arith.negf %14 : vector<16x128xf32>
      %18 = math.exp %17 : vector<16x128xf32>
      %cst = arith.constant 1.000000e+00 : f32
      %19 = vector.broadcast %cst : f32 to vector<16x128xf32>
      %20 = arith.addf %19, %18 : vector<16x128xf32>
      %21 = arith.divf %19, %20 : vector<16x128xf32>
      %22 = arith.mulf %21, %16 : vector<16x128xf32>
      %23 = vector.shape_cast %22 : vector<16x128xf32> to vector<2x8x128xf32>
      %24 = arith.addf %21, %16 : vector<16x128xf32>
      %25 = vector.shape_cast %24 : vector<16x128xf32> to vector<2x8x128xf32>
      %c0_7 = arith.constant 0 : index
      %c0_8 = arith.constant 0 : index
      %26 = vector.load %arg5[%c0_7, %c0_8] : memref<8x128xf32, #tpu.memory_space<vmem>>, vector<8x128xf32>
      %cst_9 = arith.constant dense<0.000000e+00> : vector<8x128xf32>
      %27 = vector.multi_reduction <add>, %23, %cst_9 [0] : vector<2x8x128xf32> to vector<8x128xf32>
      %28 = arith.addf %26, %27 : vector<8x128xf32>
      %c0_10 = arith.constant 0 : index
      %c0_11 = arith.constant 0 : index
      %29 = vector.load %arg5[%c0_10, %c0_11] : memref<8x128xf32, #tpu.memory_space<vmem>>, vector<8x128xf32>
      tpu.vector_store %arg5[%c0_10, %c0_11], %28 {strides = array<i32>} : memref<8x128xf32, #tpu.memory_space<vmem>>, vector<8x128xf32>,
      %c0_12 = arith.constant 0 : index
      %c0_13 = arith.constant 0 : index
      %30 = vector.load %arg6[%c0_12, %c0_13] : memref<8x128xf32, #tpu.memory_space<vmem>>, vector<8x128xf32>
      %cst_14 = arith.constant dense<0.000000e+00> : vector<8x128xf32>
      %31 = vector.multi_reduction <add>, %25, %cst_14 [0] : vector<2x8x128xf32> to vector<8x128xf32>
      %32 = arith.addf %30, %31 : vector<8x128xf32>
      %c0_15 = arith.constant 0 : index
      %c0_16 = arith.constant 0 : index
      %33 = vector.load %arg6[%c0_15, %c0_16] : memref<8x128xf32, #tpu.memory_space<vmem>>, vector<8x128xf32>
      tpu.vector_store %arg6[%c0_15, %c0_16], %32 {strides = array<i32>} : memref<8x128xf32, #tpu.memory_space<vmem>>, vector<8x128xf32>,
      %c1_i32_17 = arith.constant 1 : i32
    } else {
    }
    %c0_i32_3 = arith.constant 0 : i32
    %8 = arith.cmpi eq, %arg1, %c0_i32_3 : i32
    %9 = arith.extui %8 : i1 to i32
    %c0_i32_4 = arith.constant 0 : i32
    %10 = arith.cmpi ne, %9, %c0_i32_4 : i32
    scf.if %10 {
      %c0 = arith.constant 0 : index
      %c0_5 = arith.constant 0 : index
      %11 = vector.load %arg5[%c0, %c0_5] : memref<8x128xf32, #tpu.memory_space<vmem>>, vector<8x128xf32>
      %c0_6 = arith.constant 0 : index
      %c0_7 = arith.constant 0 : index
      %c0_8 = arith.constant 0 : index
      %c0_9 = arith.constant 0 : index
      %12 = vector.load %arg4[%c0_6, %c0_7, %c0_8, %c0_9] : memref<1x2x8x128xf32, #tpu.memory_space<vmem>>, vector<1x1x8x128xf32>
      %13 = vector.shape_cast %12 : vector<1x1x8x128xf32> to vector<8x128xf32>
      %14 = vector.shape_cast %11 : vector<8x128xf32> to vector<1x1x8x128xf32>
      tpu.vector_store %arg4[%c0_6, %c0_7, %c0_8, %c0_9], %14 {strides = array<i32>} : memref<1x2x8x128xf32, #tpu.memory_space<vmem>>, vector<1x1x8x128xf32>,
      %c0_10 = arith.constant 0 : index
      %c0_11 = arith.constant 0 : index
      %15 = vector.load %arg6[%c0_10, %c0_11] : memref<8x128xf32, #tpu.memory_space<vmem>>, vector<8x128xf32>
      %c0_12 = arith.constant 0 : index
      %c1 = arith.constant 1 : index
      %c0_13 = arith.constant 0 : index
      %c0_14 = arith.constant 0 : index
      %16 = vector.load %arg4[%c0_12, %c1, %c0_13, %c0_14] : memref<1x2x8x128xf32, #tpu.memory_space<vmem>>, vector<1x1x8x128xf32>
      %17 = vector.shape_cast %16 : vector<1x1x8x128xf32> to vector<8x128xf32>
      %18 = vector.shape_cast %15 : vector<8x128xf32> to vector<1x1x8x128xf32>
      tpu.vector_store %arg4[%c0_12, %c1, %c0_13, %c0_14], %18 {strides = array<i32>} : memref<1x2x8x128xf32, #tpu.memory_space<vmem>>, vector<1x1x8x128xf32>,
    } else {
    }
    return
  }
  func.func @transform_0(%arg0: i32, %arg1: i32) -> (i32, i32) {
    %c1_i32 = arith.constant 1 : i32
    %0 = arith.muli %arg0, %c1_i32 : i32
    %1 = arith.addi %0, %arg1 : i32
    %c0_i32 = arith.constant 0 : i32
    %2 = arith.minsi %1, %c0_i32 : i32
    %c0_i32_0 = arith.constant 0 : i32
    %c0_i32_1 = arith.constant 0 : i32
    return %2, %c0_i32_0 : i32, i32
  }
  func.func @transform_1(%arg0: i32, %arg1: i32) -> (i32, i32) {
    %c1_i32 = arith.constant 1 : i32
    %0 = arith.muli %arg0, %c1_i32 : i32
    %1 = arith.addi %0, %arg1 : i32
    %c0_i32 = arith.constant 0 : i32
    %2 = arith.minsi %1, %c0_i32 : i32
    %c0_i32_0 = arith.constant 0 : i32
    %c0_i32_1 = arith.constant 0 : i32
    return %2, %c0_i32_0 : i32, i32
  }
  func.func @transform_2(%arg0: i32, %arg1: i32) -> (i32, i32, i32, i32) {
    %c0_i32 = arith.constant 0 : i32
    %c0_i32_0 = arith.constant 0 : i32
    %c0_i32_1 = arith.constant 0 : i32
    %c0_i32_2 = arith.constant 0 : i32
    return %arg0, %c0_i32, %c0_i32_0, %c0_i32_1 : i32, i32, i32, i32
  }
}

</mosaic_0001>

<llo_original>
// kernel: tpu_custom_call.1
$region0: #{tpu_custom_call.1}
  #allocation0 [shape = 'u32[]', space=smem, size = 0x4, offset = 0x4, fixed_abs, tag = 'smem constant byte address 0x4 - core index']
  #allocation1 [shape = 'u32[144,128]{1,0:T(1,128)}', space=vmem, size = 0x12000, scoped, tag = 'internal scratch']
  #allocation2 [shape = 'f32[8,128]{1,0:T(8,128)}', space=vmem, size = 0x1000, scoped, tag = 'scratch operand']
  #allocation3 [shape = 'f32[8,128]{1,0:T(8,128)}', space=vmem, size = 0x1000, scoped, tag = 'scratch operand']
  %s0 = inlined_call_operand.hbm [shape: f32[16,128], index: 0, kind: input, shape index: {}]
  %s1 = inlined_call_operand.hbm [shape: f32[16,128], index: 1, kind: input, shape index: {}]
  %s2 = inlined_call_operand.hbm [shape: f32[2,2,8,128], index: 2, kind: output, shape index: {}]
  %s3 = sld [smem:[#allocation0]]
  $region61: #{tpu_custom_call.1} parent=0
    _
  %s5 = ssub.s32 1, %s3
  %s6 = scalar_select 0, %s5, %s3
  $region1: #{tpu_custom_call.1} parent=0
    #allocation4 [shape = 'u8[16384]{0}', space=vmem, size = 0x4000, scoped, tag = 'input window, operand 0']
    #allocation5 [shape = 's32[2]{0}', space=sflag, size = 0x8, scoped, tag = 'scoped memory for tpu_custom_call.1']
    #allocation6 [shape = 's32[2]{0}', space=sflag, size = 0x8, scoped, tag = 'scoped memory for tpu_custom_call.1']
    #allocation7 [shape = 'u8[16384]{0}', space=vmem, size = 0x4000, scoped, tag = 'input window, operand 1']
    #allocation8 [shape = 's32[2]{0}', space=sflag, size = 0x8, scoped, tag = 'scoped memory for tpu_custom_call.1']
    #allocation9 [shape = 'u8[16384]{0}', space=vmem, size = 0x4000, scoped, tag = 'output window, operand 0']
    %7 = vsyncpa [#allocation5], 0
    %s8 = scalar_lea.sflag [#allocation5], 1
    %9 = vsyncpa %s8, 0
    %10 = vsyncpa [#allocation8], 0
    %s11 = scalar_lea.sflag [#allocation8], 1
    %12 = vsyncpa %s11, 0
    %13 = vsyncpa [#allocation6], 0
    %s14 = scalar_lea.sflag [#allocation6], 1
    %15 = vsyncpa %s14, 0
    loop: start=0, step=1, limit=4
    $region2: #{tpu_custom_call.1} parent=1 // loop_pre_header
      _
    $region3: #{tpu_custom_call.1} parent=1 // loop_header
      %s17 = sphi 0, %s21
      %p18 = scmp.ge.s32.totalorder %s17, 4
      %s24 = sphi 0, %s36
      %s25 = sphi 0, %s32
      %s26 = sphi 0, %s24
      %s27 = sphi 0, %s25
      %s28 = sphi 0, %s26
      %s29 = sphi 0, %s27
      %s45 = sphi 0, %s47
      %s48 = sphi 0, %s45
      %s49 = sphi 0, %s48
      %s65 = sphi 0, %s49
      %s77 = sphi 0, %s79
      %s80 = sphi 0, %s77
      %s81 = sphi 0, %s80
      %s97 = sphi 0, %s81
      %s103 = sphi 0, %s105
      %s106 = sphi 0, %s103
      %s107 = sphi 0, %s106
      %s123 = sphi 0, %s107
    $region4: #{tpu_custom_call.1} parent=1 // loop_header_branch
      %20 = sbr.rel (%p18) target = $region8
    $region5: #{tpu_custom_call.1} parent=1 // loop_body
      %s22 = ssub.s32 %s17, 1
      %s23 = ssub.s32 %s17, 2
      %s30 = sadd.s32 1, %s25
      %p31 = scmp.ge.s32.totalorder %s30, 1
      %s32 = scalar_select %p31, 0, %s30
      %s33 = sadd.s32 1, %s24
      %s34 = scalar_select %p31, %s33, %s24
      %p35 = scmp.ge.s32.totalorder %s34, 2
      %s36 = scalar_select %p35, 0, %s34
      %s37 = sadd.s32 %s24, %s25
      %p38 = scmp.lt.s32.totalorder %s37, 0
      %s39 = scalar_select %p38, %s37, 0
      %s40 = sadd.s32 %s36, %s32
      %p41 = scmp.lt.s32.totalorder %s40, 0
      %s42 = scalar_select %p41, %s40, 0
      %s43 = ssub.s32 %s39, %s42
      %p44 = scmp.eq.s32.totalorder %s43, 0
      %s46 = sadd.s32 %s45, 1
      %s47 = scalar_select %p44, %s45, %s46
      %p50 = pneg %p44
      %p51 = scmp.eq.s32.totalorder %s17, 1
      %p52 = por %p50, %p51
      %p53 = scmp.ne.s32.totalorder %s45, %s48
      %p54 = scmp.eq.s32.totalorder %s17, 0
      %p55 = por %p53, %p54
      %p56 = scmp.ne.s32.totalorder %s45, %s48
      %p57 = scmp.eq.s32.totalorder %s22, 1
      %p58 = por %p56, %p57
      %p59 = scmp.ne.s32.totalorder %s48, %s49
      %p60 = scmp.eq.s32.totalorder %s22, 0
      %p61 = por %p59, %p60
      %p62 = scmp.ne.s32.totalorder %s48, %s49
      %p63 = scmp.eq.s32.totalorder %s23, 1
      %p64 = por %p62, %p63
      %p66 = scmp.ne.s32.totalorder %s49, %s65
      %p67 = scmp.eq.s32.totalorder %s23, 0
      %p68 = por %p66, %p67
      %s69 = sadd.s32 %s24, %s25
      %p70 = scmp.lt.s32.totalorder %s69, 0
      %s71 = scalar_select %p70, %s69, 0
      %s72 = sadd.s32 %s36, %s32
      %p73 = scmp.lt.s32.totalorder %s72, 0
      %s74 = scalar_select %p73, %s72, 0
      %s75 = ssub.s32 %s71, %s74
      %p76 = scmp.eq.s32.totalorder %s75, 0
      %s78 = sadd.s32 %s77, 1
      %s79 = scalar_select %p76, %s77, %s78
      %p82 = pneg %p76
      %p83 = scmp.eq.s32.totalorder %s17, 1
      %p84 = por %p82, %p83
      %p85 = scmp.ne.s32.totalorder %s77, %s80
      %p86 = scmp.eq.s32.totalorder %s17, 0
      %p87 = por %p85, %p86
      %p88 = scmp.ne.s32.totalorder %s77, %s80
      %p89 = scmp.eq.s32.totalorder %s22, 1
      %p90 = por %p88, %p89
      %p91 = scmp.ne.s32.totalorder %s80, %s81
      %p92 = scmp.eq.s32.totalorder %s22, 0
      %p93 = por %p91, %p92
      %p94 = scmp.ne.s32.totalorder %s80, %s81
      %p95 = scmp.eq.s32.totalorder %s23, 1
      %p96 = por %p94, %p95
      %p98 = scmp.ne.s32.totalorder %s81, %s97
      %p99 = scmp.eq.s32.totalorder %s23, 0
      %p100 = por %p98, %p99
      %s101 = ssub.s32 %s24, %s36
      %p102 = scmp.eq.s32.totalorder %s101, 0
      %s104 = sadd.s32 %s103, 1
      %s105 = scalar_select %p102, %s103, %s104
      %p108 = pneg %p102
      %p109 = scmp.eq.s32.totalorder %s17, 1
      %p110 = por %p108, %p109
      %p111 = scmp.ne.s32.totalorder %s103, %s106
      %p112 = scmp.eq.s32.totalorder %s17, 0
      %p113 = por %p111, %p112
      %p114 = scmp.ne.s32.totalorder %s103, %s106
      %p115 = scmp.eq.s32.totalorder %s22, 1
      %p116 = por %p114, %p115
      %p117 = scmp.ne.s32.totalorder %s106, %s107
      %p118 = scmp.eq.s32.totalorder %s22, 0
      %p119 = por %p117, %p118
      %p120 = scmp.ne.s32.totalorder %s106, %s107
      %p121 = scmp.eq.s32.totalorder %s23, 1
      %p122 = por %p120, %p121
      %p124 = scmp.ne.s32.totalorder %s107, %s123
      %p125 = scmp.eq.s32.totalorder %s23, 0
      %p126 = por %p124, %p125
      %p127 = scmp.le.s32.totalorder 1, %s17
      %p128 = scmp.lt.s32.totalorder %s17, 3
      %p129 = pnand %p127, %p128
      %p130 = pneg %p129
      // Predicated region
      $region9: #{tpu_custom_call.1} parent=5 // pred_check
        _
      $region10: #{tpu_custom_call.1} parent=5 // pred_check_branch
        %132 = sbr.rel (%p129) target = $region12
      $region11: #{tpu_custom_call.1} parent=5 // pred_region
        %s133 = ssub.s32 %s17, 1
      $region12: #{tpu_custom_call.1} parent=5 // pred_fallthru
        _
      %p134 = scmp.lt.s32.totalorder %s17, 2
      // Predicated region
      $region13: #{tpu_custom_call.1} parent=5 // pred_check
        %p135 = pneg %p134
      $region14: #{tpu_custom_call.1} parent=5 // pred_check_branch
        %137 = sbr.rel (%p135) target = $region16
      $region15: #{tpu_custom_call.1} parent=5 // pred_region
        // Predicated region
        $region17: #{tpu_custom_call.1} parent=15 // pred_check
          %p138 = pneg %p55
        $region18: #{tpu_custom_call.1} parent=15 // pred_check_branch
          %140 = sbr.rel (%p138) target = $region20
        $region19: #{tpu_custom_call.1} parent=15 // pred_region
          %s141 = sand.u32 %s45, 1
          %s142 = scalar_lea.sflag [#allocation5], %s141
          %s143 = sand.u32 %s45, 1
          %s144 = smul.addr %s143, 16
          %s145 = scalar_lea.vmem [#allocation4], %s144
          %s146 = sadd.s32 %s24, %s25
          %p147 = scmp.lt.s32.totalorder %s146, 0
          %s148 = scalar_select %p147, %s146, 0
          %s149 = smul.u32 2, %s148
          %s151 = ssub.s32 256, 256
          %152 = vsyncadd %s142, %s151
          %s153 = smul.addr %s149, 128
          %s154 = scalar_lea.hbm %s0, %s153
          %s155 = sshll.u32 %s145, 4
          %s156 = int_to_ptr.vmem [resolvable:$true] %s155
          %161 = dma.hbm_to_vmem [thread:$0]  %s154, 256, %s156, %s142, 128, 128, 8
        $region20: #{tpu_custom_call.1} parent=15 // pred_fallthru
          _
        // Predicated region
        $region21: #{tpu_custom_call.1} parent=15 // pred_check
          %p162 = pneg %p87
        $region22: #{tpu_custom_call.1} parent=15 // pred_check_branch
          %164 = sbr.rel (%p162) target = $region24
        $region23: #{tpu_custom_call.1} parent=15 // pred_region
          %s165 = sand.u32 %s77, 1
          %s166 = scalar_lea.sflag [#allocation8], %s165
          %s167 = sand.u32 %s77, 1
          %s168 = smul.addr %s167, 16
          %s169 = scalar_lea.vmem [#allocation7], %s168
          %s170 = sadd.s32 %s24, %s25
          %p171 = scmp.lt.s32.totalorder %s170, 0
          %s172 = scalar_select %p171, %s170, 0
          %s173 = smul.u32 2, %s172
          %s175 = ssub.s32 256, 256
          %176 = vsyncadd %s166, %s175
          %s177 = smul.addr %s173, 128
          %s178 = scalar_lea.hbm %s1, %s177
          %s179 = sshll.u32 %s169, 4
          %s180 = int_to_ptr.vmem [resolvable:$true] %s179
          %185 = dma.hbm_to_vmem [thread:$0]  %s178, 256, %s180, %s166, 128, 128, 8
        $region24: #{tpu_custom_call.1} parent=15 // pred_fallthru
          _
      $region16: #{tpu_custom_call.1} parent=5 // pred_fallthru
        _
      %p186 = scmp.le.s32.totalorder 1, %s17
      %p187 = scmp.lt.s32.totalorder %s17, 3
      %p188 = pnand %p186, %p187
      %p189 = pneg %p188
      // Predicated region
      $region25: #{tpu_custom_call.1} parent=5 // pred_check
        _
      $region26: #{tpu_custom_call.1} parent=5 // pred_check_branch
        %191 = sbr.rel (%p188) target = $region28
      $region27: #{tpu_custom_call.1} parent=5 // pred_region
        %s192 = ssub.s32 %s17, 1
        %s193 = sand.u32 %s48, 1
        %s194 = scalar_lea.sflag [#allocation5], %s193
        %s195 = sand.u32 %s48, 1
        %s196 = smul.addr %s195, 16
        %s197 = scalar_lea.vmem [#allocation4], %s196
        // Predicated region
        $region29: #{tpu_custom_call.1} parent=27 // pred_check
          %p198 = pneg %p61
        $region30: #{tpu_custom_call.1} parent=27 // pred_check_branch
          %200 = sbr.rel (%p198) target = $region32
        $region31: #{tpu_custom_call.1} parent=27 // pred_region
          %201 = dma.done %s194, 256
        $region32: #{tpu_custom_call.1} parent=27 // pred_fallthru
          _
        %s202 = sand.u32 %s80, 1
        %s203 = scalar_lea.sflag [#allocation8], %s202
        %s204 = sand.u32 %s80, 1
        %s205 = smul.addr %s204, 16
        %s206 = scalar_lea.vmem [#allocation7], %s205
        // Predicated region
        $region33: #{tpu_custom_call.1} parent=27 // pred_check
          %p207 = pneg %p93
        $region34: #{tpu_custom_call.1} parent=27 // pred_check_branch
          %209 = sbr.rel (%p207) target = $region36
        $region35: #{tpu_custom_call.1} parent=27 // pred_region
          %210 = dma.done %s203, 256
        $region36: #{tpu_custom_call.1} parent=27 // pred_fallthru
          _
        %s211 = sand.u32 %s48, 1
        %s212 = scalar_lea.sflag [#allocation5], %s211
        %s213 = sand.u32 %s48, 1
        %s214 = smul.addr %s213, 16
        %s215 = scalar_lea.vmem [#allocation4], %s214
        %p216 = pneg %p61
        %p217 = pneg %p58
        %s218 = sand.u32 %s80, 1
        %s219 = scalar_lea.sflag [#allocation8], %s218
        %s220 = sand.u32 %s80, 1
        %s221 = smul.addr %s220, 16
        %s222 = scalar_lea.vmem [#allocation7], %s221
        %p223 = pneg %p93
        %p224 = pneg %p90
        %p225 = pneg %p119
        %p226 = pneg %p116
        %s227 = sand.u32 %s106, 1
        %s228 = scalar_lea.sflag [#allocation6], %s227
        %s229 = sand.u32 %s106, 1
        %s230 = smul.addr %s229, 16
        %s231 = scalar_lea.vmem [#allocation9], %s230
        %s232 = sadd.s32 %s26, %s27
        %p233 = scmp.lt.s32.totalorder %s232, 0
        %s234 = scalar_select %p233, %s232, 0
        %s235 = smul.u32 2, %s234
        %s236 = sadd.s32 %s26, %s27
        %p237 = scmp.lt.s32.totalorder %s236, 0
        %s238 = scalar_select %p237, %s236, 0
        %s239 = smul.u32 2, %s238
        %p240 = scmp.eq.s32.totalorder %s27, 0
        // Predicated region
        $region37: #{tpu_custom_call.1} parent=27 // pred_check
          %p241 = pneg %p240
        $region38: #{tpu_custom_call.1} parent=27 // pred_check_branch
          %243 = sbr.rel (%p241) target = $region40
        $region39: #{tpu_custom_call.1} parent=27 // pred_region
          %244 = vst [vmem:[#allocation2] sm:$0xff] 0.0
          %245 = vst [vmem:[#allocation3] sm:$0xff] 0.0
        $region40: #{tpu_custom_call.1} parent=27 // pred_fallthru
          _
        %s246 = sadd.s32 %s26, %s27
        %p247 = scmp.lt.s32.totalorder %s246, 1
        // Predicated region
        $region41: #{tpu_custom_call.1} parent=27 // pred_check
          %p248 = pneg %p247
        $region42: #{tpu_custom_call.1} parent=27 // pred_check_branch
          %250 = sbr.rel (%p248) target = $region44
        $region43: #{tpu_custom_call.1} parent=27 // pred_region
          %v251 = vld [vmem:[%s197] sm:$0xff]
          %v252 = vld [vmem:[%s197 + $0x8] sm:$0xff]
          %v253 = vld [vmem:[%s206] sm:$0xff]
          %v254 = vld [vmem:[%s206 + $0x8] sm:$0xff]
          %v255 = vxor.u32 %v251, 2147483648
          %v256 = vxor.u32 %v252, 2147483648
          %v257 = vmul.f32 %v255, 1.442695
          %v258 = vpow.pop %v257
          %v259 = vmul.f32 %v256, 1.442695
          %v260 = vpow.pop %v259
          %v261 = vadd.f32 %v258, 1.0
          %v262 = vadd.f32 %v260, 1.0
          %v263 = vrcp.pop %v261
          %v264 = vmul.f32 1.0, %v263
          %v265 = vrcp.pop %v262
          %v266 = vmul.f32 1.0, %v265
          %v267 = vmul.f32 %v264, %v253
          %v268 = vmul.f32 %v266, %v254
          %v269 = vadd.f32 %v264, %v253
          %v270 = vadd.f32 %v266, %v254
          %v271 = vld [vmem:[#allocation2] sm:$0xff]
          %v272 = vadd.f32 %v267, %v268
          %v273 = vadd.f32 %v271, %v272
          %274 = vst [vmem:[#allocation2] sm:$0xff] %v273
          %v275 = vld [vmem:[#allocation3] sm:$0xff]
          %v276 = vadd.f32 %v269, %v270
          %v277 = vadd.f32 %v275, %v276
          %278 = vst [vmem:[#allocation3] sm:$0xff] %v277
        $region44: #{tpu_custom_call.1} parent=27 // pred_fallthru
          _
        // Predicated region
        $region45: #{tpu_custom_call.1} parent=27 // pred_check
          %p279 = pneg %p240
        $region46: #{tpu_custom_call.1} parent=27 // pred_check_branch
          %281 = sbr.rel (%p279) target = $region48
        $region47: #{tpu_custom_call.1} parent=27 // pred_region
          %v282 = vld [vmem:[#allocation2] sm:$0xff]
          %283 = vst [vmem:[%s231] sm:$0xff] %v282
          %v284 = vld [vmem:[#allocation3] sm:$0xff]
          %s285 = scalar_lea.vmem %s231, 8 [#allocation9]
          %286 = vst [vmem:[%s285] sm:$0xff] %v284
        $region48: #{tpu_custom_call.1} parent=27 // pred_fallthru
          _
        %s287 = sand.u32 %s106, 1
        %s288 = scalar_lea.sflag [#allocation6], %s287
        %s289 = sand.u32 %s106, 1
        %s290 = smul.addr %s289, 16
        %s291 = scalar_lea.vmem [#allocation9], %s290
        // Predicated region
        $region49: #{tpu_custom_call.1} parent=27 // pred_check
          %p292 = pneg %p116
        $region50: #{tpu_custom_call.1} parent=27 // pred_check_branch
          %294 = sbr.rel (%p292) target = $region52
        $region51: #{tpu_custom_call.1} parent=27 // pred_region
          %s296 = ssub.s32 256, 256
          %297 = vsyncadd %s288, %s296
          %s298 = smul.addr %s26, 2
          %s299 = smul.addr %s298, 128
          %s300 = scalar_lea.hbm %s2, %s299
          %s301 = sshll.u32 %s291, 4
          %s302 = int_to_ptr.vmem [resolvable:$true] %s301
          %307 = dma.vmem_to_hbm [thread:$0]  %s302, 256, %s300, %s288, 128, 128, 8
        $region52: #{tpu_custom_call.1} parent=27 // pred_fallthru
          _
      $region28: #{tpu_custom_call.1} parent=5 // pred_fallthru
        _
      %p308 = scmp.le.s32.totalorder 2, %s17
      // Predicated region
      $region53: #{tpu_custom_call.1} parent=5 // pred_check
        %p309 = pneg %p308
      $region54: #{tpu_custom_call.1} parent=5 // pred_check_branch
        %311 = sbr.rel (%p309) target = $region56
      $region55: #{tpu_custom_call.1} parent=5 // pred_region
        %s312 = ssub.s32 %s17, 2
        // Predicated region
        $region57: #{tpu_custom_call.1} parent=55 // pred_check
          %p313 = pneg %p122
        $region58: #{tpu_custom_call.1} parent=55 // pred_check_branch
          %315 = sbr.rel (%p313) target = $region60
        $region59: #{tpu_custom_call.1} parent=55 // pred_region
          %s316 = sand.u32 %s107, 1
          %s317 = scalar_lea.sflag [#allocation6], %s316
          %s318 = sand.u32 %s107, 1
          %s319 = smul.addr %s318, 16
          %s320 = scalar_lea.vmem [#allocation9], %s319
          %321 = dma.done %s317, 256
        $region60: #{tpu_custom_call.1} parent=55 // pred_fallthru
          _
      $region56: #{tpu_custom_call.1} parent=5 // pred_fallthru
        _
    $region6: #{tpu_custom_call.1} parent=1 // loop_footer
      %s21 = sadd.s32 1, %s17
    $region7: #{tpu_custom_call.1} parent=1 // loop_footer_branch
      %16 = sbr.rel target = $region3
    $region8: #{tpu_custom_call.1} parent=1 // loop_exit
      _
    %322 = vsyncpa [#allocation5], 1
    %s323 = scalar_lea.sflag [#allocation5], 1
    %324 = vsyncpa %s323, 1
    %325 = vsyncpa [#allocation8], 1
    %s326 = scalar_lea.sflag [#allocation8], 1
    %327 = vsyncpa %s326, 1
    %328 = vsyncpa [#allocation6], 1
    %s329 = scalar_lea.sflag [#allocation6], 1
    %330 = vsyncpa %s329, 1

</llo_original>
